<compile_context>
chip_gen: v7x
topology: tpu7x:2x2x1
jax: 0.10.0
libtpu: 0.0.40
codegen_flags: <defaults>
</compile_context>

<pallas_src>
import numpy as np
import jax
import jax.numpy as jnp
from jax import lax
from jax.experimental import pallas as pl
from jax.experimental.pallas import tpu as pltpu


# ----------------------------------------------------------------------------
# Host-side (glue): PIL-style bicubic resampling matrices + geometry.
# ----------------------------------------------------------------------------
def _bicubic_weight(x, a=-0.5):
    ax = np.abs(x)
    return np.where(
        ax < 1.0,
        ((a + 2.0) * ax - (a + 3.0)) * ax * ax + 1.0,
        np.where(ax < 2.0, (((ax - 5.0) * ax + 8.0) * ax - 4.0) * a, 0.0),
    )


def _resize_matrix(in_size: int, out_size: int) -> np.ndarray:
    """PIL-style separable BICUBIC (antialiased) resampling matrix (out, in)."""
    support = 2.0  # bicubic filter support
    scale = in_size / out_size
    filterscale = max(scale, 1.0)
    supp = support * filterscale
    mat = np.zeros((out_size, in_size), dtype=np.float64)
    for i in range(out_size):
        center = (i + 0.5) * scale
        xmin = max(int(center - supp + 0.5), 0)
        xmax = min(int(center + supp + 0.5), in_size)
        js = np.arange(xmin, xmax)
        w = _bicubic_weight((js + 0.5 - center) / filterscale)
        s = w.sum()
        if s != 0.0:
            w = w / s
        mat[i, xmin:xmax] = w
    return mat.astype(np.float32)


def _resize_pad_geometry(H, W, TH, TW):
    """Exact port of ResizeAndPad.forward geometry (PIL size = (w, h))."""
    aspect_ratio = W / H
    target_aspect_ratio = TW / TH  # target_size[1] / target_size[0]
    if aspect_ratio > target_aspect_ratio:
        new_w = TW
        new_h = int(round(new_w / aspect_ratio))
        diff = TH - new_h
        top, left = diff // 2, 0
    else:
        new_h = TH
        new_w = int(round(new_h * aspect_ratio))
        diff = TW - new_w
        left, top = diff // 2, 0
    assert new_h >= 1 and new_w >= 1, "degenerate resize geometry"
    return new_h, new_w, top, left


def _build_matrices(H, W, TH, TW):
    """Unpadded resize+pad matrices: py (TH, H), pxt (W, TW)."""
    new_h, new_w, top, left = _resize_pad_geometry(H, W, TH, TW)
    ry = _resize_matrix(H, new_h)  # (new_h, H)
    rx = _resize_matrix(W, new_w)  # (new_w, W)
    py = np.zeros((TH, H), dtype=np.float32)
    py[top:top + new_h, :] = ry
    pxt = np.zeros((W, TW), dtype=np.float32)
    pxt[:, left:left + new_w] = rx.T
    return py, pxt


def _round_up(v, g):
    return -(-v // g) * g


def _chip_profile():
    """Per-generation VMEM policy derived from the actual chip."""
    vmem_cap = None
    try:
        info = pltpu.get_tpu_info()
        vmem_cap = int(info.vmem_capacity_bytes)
    except Exception:
        vmem_cap = None
    if vmem_cap is None:
        vmem_cap = 64 * 1024 * 1024  # conservative default (v7x-class)
    if vmem_cap <= 64 * 1024 * 1024:
        # v7x-class: 64 MiB per TensorCore, 2 TensorCores per chip.
        return {
            "budget": int(vmem_cap * 0.62),   # ~40 MiB for block sizing
            "limit": int(vmem_cap * 0.82),    # ~52 MiB: headroom for Mosaic
            "two_cores": True,
        }
    # v5e / v6e-class: 128 MiB VMEM, single TensorCore.
    return {
        "budget": min(int(vmem_cap * 0.63), 80 * 1024 * 1024),
        "limit": min(int(vmem_cap * 0.75), 96 * 1024 * 1024),
        "two_cores": False,
    }


def _choose_batch(nc, per_plane_bytes, resident_bytes, fixed_bytes,
                  budget_bytes, two_cores, max_b=256):
    """Largest divisor of nc whose footprint fits the VMEM budget.

    On 2-TensorCore (v7x-class) parts, prefer >= 2 (ideally an even number of)
    grid steps so both cores get work; on single-core chips let B == nc.
    """
    avail = budget_bytes - resident_bytes - fixed_bytes
    b_cap = max(1, avail // max(per_plane_bytes, 1))
    b_cap = int(min(b_cap, max_b, nc))
    divisors = [d for d in range(1, nc + 1) if nc % d == 0 and d <= b_cap]
    if not divisors:
        return 1
    b = max(divisors)
    if two_cores and b == nc and nc > 1:
        pref = [d for d in divisors if (nc // d) >= 2 and (nc // d) % 2 == 0]
        alt = [d for d in divisors if (nc // d) >= 2]
        if pref:
            b = max(pref)
        elif alt:
            b = max(alt)
    return b


# ----------------------------------------------------------------------------
# Pallas kernel: B planes per grid step, two bf16 MXU matmuls per plane.
# ----------------------------------------------------------------------------
def _make_kernel(B, x_first, out_dtype, unroll):
    def kernel(py_ref, img_ref, pxt_ref, out_ref):
        py = py_ref[...]     # (TH_pad, H)  bf16, stationary across the grid
        pxt = pxt_ref[...]   # (W, TW_pad)  bf16, stationary across the grid

        def body(b, carry):
            plane = img_ref[b]                       # (H, W) bf16, aligned view
            if x_first:
                # Contract W first: (H,W)@(W,TW_pad) -> (H,TW_pad), then P_y.
                t = jnp.dot(plane, pxt, preferred_element_type=jnp.float32)
                o = jnp.dot(py, t.astype(jnp.bfloat16),
                            preferred_element_type=jnp.float32)
            else:
                # Contract H first: (TH_pad,H)@(H,W) -> (TH_pad,W), then P_x^T.
                t = jnp.dot(py, plane, preferred_element_type=jnp.float32)
                o = jnp.dot(t.astype(jnp.bfloat16), pxt,
                            preferred_element_type=jnp.float32)
            out_ref[b] = o.astype(out_dtype)         # (TH_pad, TW_pad) unmasked
            return carry

        lax.fori_loop(0, B, body, 0, unroll=unroll)

    return kernel


def resize_and_pad(x: jax.Array, target_size: tuple[int, int]) -> jax.Array:
    """x: (N, C, H, W) image batch -> (N, C, TH, TW) float32."""
    N, C, H, W = x.shape
    TH, TW = target_size

    # Lane/sublane padding of the OUTPUT via extra zero rows/cols in the static
    # interpolation matrices (free host-side, numerically a no-op).
    TH_pad = _round_up(TH, 8)
    TW_pad = _round_up(TW, 128)

    py_u, pxt_u = _build_matrices(H, W, TH, TW)          # (TH, H), (W, TW)
    py_np = np.zeros((TH_pad, H), dtype=np.float32)
    py_np[:TH, :] = py_u
    pxt_np = np.zeros((W, TW_pad), dtype=np.float32)
    pxt_np[:, :TW] = pxt_u

    # Contraction order via MXU-granule-aware pass cost (256 granule covers
    # v6e/v7x; on v5e it only over-rounds both orders equally).
    g = 256
    Hg, Wg = _round_up(H, g), _round_up(W, g)
    THg, TWg = _round_up(TH_pad, g), _round_up(TW_pad, g)
    cost_x_first = Hg * Wg * TWg + THg * Hg * TWg
    cost_y_first = THg * Hg * Wg + THg * Wg * TWg
    x_first = cost_x_first <= cost_y_first

    prof = _chip_profile()

    # VMEM accounting (bytes): bf16 input plane + f32 output plane (both
    # double-buffered by the pipeline), stationary bf16 matrices (x2 buffers),
    # per-plane f32 intermediate (live value, x worst-case unroll of 8) and
    # slack for Mosaic internal scratch.
    inter_elems = H * TW_pad if x_first else TH_pad * W
    per_plane = (H * W * 2 + TH_pad * TW_pad * 4) * 2
    resident = (TH_pad * H + W * TW_pad) * 2 * 2
    fixed = 8 * inter_elems * 6 + 2 * TH_pad * TW_pad * 4 + (2 << 20)

    NC = N * C
    B = _choose_batch(NC, per_plane, resident, fixed,
                      prof["budget"], prof["two_cores"])
    G = NC // B
    unroll = max(u for u in (8, 4, 2, 1) if B % u == 0)

    kernel = _make_kernel(B, x_first, jnp.float32, unroll)

    # bf16 image planes: halves input DMA bytes / VMEM footprint; uint8-origin
    # pixel values (0..255) are exact in bf16 and the MXU accumulates in f32.
    xf = x.astype(jnp.bfloat16).reshape(G, B, H, W)       # contiguous reshape
    py = jnp.asarray(py_np, dtype=jnp.bfloat16)
    pxt = jnp.asarray(pxt_np, dtype=jnp.bfloat16)

    out = pl.pallas_call(
        kernel,
        out_shape=jax.ShapeDtypeStruct((G, B, TH_pad, TW_pad), jnp.float32),
        grid_spec=pltpu.PrefetchScalarGridSpec(
            num_scalar_prefetch=0,
            grid=(G,),
            in_specs=[
                pl.BlockSpec((TH_pad, H), lambda i: (0, 0)),       # P_y resident
                pl.BlockSpec((None, B, H, W),
                             lambda i: (i, 0, 0, 0)),              # B planes/step
                pl.BlockSpec((W, TW_pad), lambda i: (0, 0)),       # P_x^T resident
            ],
            out_specs=pl.BlockSpec((None, B, TH_pad, TW_pad),
                                   lambda i: (i, 0, 0, 0)),
        ),
        compiler_params=pltpu.CompilerParams(
            dimension_semantics=("parallel",),
            vmem_limit_bytes=prof["limit"],
        ),
    )(py, xf, pxt)

    # Strip lane/sublane padding only when it exists (avoids an extra HBM pass
    # when TH/TW are already aligned) and restore NCHW.
    out = out.reshape(NC, TH_pad, TW_pad)
    if TH_pad != TH or TW_pad != TW:
        out = out[:, :TH, :TW]
    return out.reshape(N, C, TH, TW)


if __name__ == "__main__":
    key = jax.random.PRNGKey(0)
    # Small non-square image so both the resize and the pad branch are
    # exercised: W/H = 16/12 > target 16/16 -> new_w=16, new_h=12, pad top 2.
    N, C, H, W = 2, 4, 12, 16
    target_size = (16, 16)  # (height, width)

    x = jax.random.uniform(key, (N, C, H, W), dtype=jnp.float32) * 255.0

    y = resize_and_pad(x, target_size)
    jax.block_until_ready(y)

    assert y.shape == (N, C, target_size[0], target_size[1])
    assert y.dtype == jnp.float32

    # Plumbing check against the same separable matrices in pure numpy
    # (catches batching / padding / slicing / contraction-order errors).
    py_u, pxt_u = _build_matrices(H, W, target_size[0], target_size[1])
    ref = np.einsum("th,nchw,wv->nctv",
                    py_u.astype(np.float64),
                    np.asarray(x, dtype=np.float64),
                    pxt_u.astype(np.float64))
    np.testing.assert_allclose(np.asarray(y), ref, rtol=2e-2, atol=2.0)

    print("KERNEL_OK")
</pallas_src>

<mosaic_0001>
module attributes {stable_mosaic.version = 11 : i64} {
  func.func @kernel(%arg0: i32, %arg1: memref<16x12xbf16, #tpu.memory_space<vmem>>, %arg2: memref<1x4x12x16xbf16, #tpu.memory_space<vmem>>, %arg3: memref<16x128xbf16, #tpu.memory_space<vmem>>, %arg4: memref<1x4x16x128xf32, #tpu.memory_space<vmem>>) attributes {dimension_semantics = [#tpu.dimension_semantics<parallel>], iteration_bounds = array<i64: 2>, scalar_prefetch = 0 : i64, scratch_operands = 0 : i64, tpu.core_type = #tpu.core_type<tc>, window_params = [{pipeline_mode = #tpu.pipeline_mode<synchronous>, transform_indices = @transform_0, window_bounds = array<i64: 16, 12>}, {transform_indices = @transform_1, window_bounds = array<i64: 1, 4, 12, 16>}, {pipeline_mode = #tpu.pipeline_mode<synchronous>, transform_indices = @transform_2, window_bounds = array<i64: 16, 128>}, {transform_indices = @transform_3, window_bounds = array<i64: 1, 4, 16, 128>}]} {
    %c0 = arith.constant 0 : index
    %c0_0 = arith.constant 0 : index
    %0 = vector.load %arg1[%c0, %c0_0] : memref<16x12xbf16, #tpu.memory_space<vmem>>, vector<16x12xbf16>
    %c0_1 = arith.constant 0 : index
    %c0_2 = arith.constant 0 : index
    %1 = vector.load %arg3[%c0_1, %c0_2] : memref<16x128xbf16, #tpu.memory_space<vmem>>, vector<16x128xbf16>
    %c0_i32 = arith.constant 0 : i32
    %c0_3 = arith.constant 0 : index
    %2 = arith.index_cast %c0_i32 : i32 to index
    %c0_4 = arith.constant 0 : index
    %c0_5 = arith.constant 0 : index
    %3 = vector.load %arg2[%c0_3, %2, %c0_4, %c0_5] : memref<1x4x12x16xbf16, #tpu.memory_space<vmem>>, vector<1x1x12x16xbf16>
    %4 = vector.shape_cast %3 : vector<1x1x12x16xbf16> to vector<12x16xbf16>
    %cst = arith.constant dense<0.000000e+00> : vector<12x128xf32>
    %5 = tpu.matmul %4, %1, %cst {dimension_numbers = #tpu.dot_dimension_numbers<[1], [0], [0], [1], [0, 0, 1, 1], [], []>} : vector<12x16xbf16>, vector<16x128xbf16>, vector<12x128xf32> -> vector<12x128xf32>
    %6 = arith.truncf %5 : vector<12x128xf32> to vector<12x128xbf16>
    %cst_6 = arith.constant dense<0.000000e+00> : vector<16x128xf32>
    %7 = tpu.matmul %0, %6, %cst_6 {dimension_numbers = #tpu.dot_dimension_numbers<[1], [0], [0], [1], [0, 0, 1, 1], [], []>} : vector<16x12xbf16>, vector<12x128xbf16>, vector<16x128xf32> -> vector<16x128xf32>
    %c0_7 = arith.constant 0 : index
    %8 = arith.index_cast %c0_i32 : i32 to index
    %c0_8 = arith.constant 0 : index
    %c0_9 = arith.constant 0 : index
    %9 = vector.load %arg4[%c0_7, %8, %c0_8, %c0_9] : memref<1x4x16x128xf32, #tpu.memory_space<vmem>>, vector<1x1x16x128xf32>
    %10 = vector.shape_cast %9 : vector<1x1x16x128xf32> to vector<16x128xf32>
    %11 = vector.shape_cast %7 : vector<16x128xf32> to vector<1x1x16x128xf32>
    tpu.vector_store %arg4[%c0_7, %8, %c0_8, %c0_9], %11 {strides = array<i32>} : memref<1x4x16x128xf32, #tpu.memory_space<vmem>>, vector<1x1x16x128xf32>,
    %c1_i32 = arith.constant 1 : i32
    %c0_10 = arith.constant 0 : index
    %12 = arith.index_cast %c1_i32 : i32 to index
    %c0_11 = arith.constant 0 : index
    %c0_12 = arith.constant 0 : index
    %13 = vector.load %arg2[%c0_10, %12, %c0_11, %c0_12] : memref<1x4x12x16xbf16, #tpu.memory_space<vmem>>, vector<1x1x12x16xbf16>
    %14 = vector.shape_cast %13 : vector<1x1x12x16xbf16> to vector<12x16xbf16>
    %cst_13 = arith.constant dense<0.000000e+00> : vector<12x128xf32>
    %15 = tpu.matmul %14, %1, %cst_13 {dimension_numbers = #tpu.dot_dimension_numbers<[1], [0], [0], [1], [0, 0, 1, 1], [], []>} : vector<12x16xbf16>, vector<16x128xbf16>, vector<12x128xf32> -> vector<12x128xf32>
    %16 = arith.truncf %15 : vector<12x128xf32> to vector<12x128xbf16>
    %cst_14 = arith.constant dense<0.000000e+00> : vector<16x128xf32>
    %17 = tpu.matmul %0, %16, %cst_14 {dimension_numbers = #tpu.dot_dimension_numbers<[1], [0], [0], [1], [0, 0, 1, 1], [], []>} : vector<16x12xbf16>, vector<12x128xbf16>, vector<16x128xf32> -> vector<16x128xf32>
    %c0_15 = arith.constant 0 : index
    %18 = arith.index_cast %c1_i32 : i32 to index
    %c0_16 = arith.constant 0 : index
    %c0_17 = arith.constant 0 : index
    %19 = vector.load %arg4[%c0_15, %18, %c0_16, %c0_17] : memref<1x4x16x128xf32, #tpu.memory_space<vmem>>, vector<1x1x16x128xf32>
    %20 = vector.shape_cast %19 : vector<1x1x16x128xf32> to vector<16x128xf32>
    %21 = vector.shape_cast %17 : vector<16x128xf32> to vector<1x1x16x128xf32>
    tpu.vector_store %arg4[%c0_15, %18, %c0_16, %c0_17], %21 {strides = array<i32>} : memref<1x4x16x128xf32, #tpu.memory_space<vmem>>, vector<1x1x16x128xf32>,
    %c2_i32 = arith.constant 2 : i32
    %c0_18 = arith.constant 0 : index
    %22 = arith.index_cast %c2_i32 : i32 to index
    %c0_19 = arith.constant 0 : index
    %c0_20 = arith.constant 0 : index
    %23 = vector.load %arg2[%c0_18, %22, %c0_19, %c0_20] : memref<1x4x12x16xbf16, #tpu.memory_space<vmem>>, vector<1x1x12x16xbf16>
    %24 = vector.shape_cast %23 : vector<1x1x12x16xbf16> to vector<12x16xbf16>
    %cst_21 = arith.constant dense<0.000000e+00> : vector<12x128xf32>
    %25 = tpu.matmul %24, %1, %cst_21 {dimension_numbers = #tpu.dot_dimension_numbers<[1], [0], [0], [1], [0, 0, 1, 1], [], []>} : vector<12x16xbf16>, vector<16x128xbf16>, vector<12x128xf32> -> vector<12x128xf32>
    %26 = arith.truncf %25 : vector<12x128xf32> to vector<12x128xbf16>
    %cst_22 = arith.constant dense<0.000000e+00> : vector<16x128xf32>
    %27 = tpu.matmul %0, %26, %cst_22 {dimension_numbers = #tpu.dot_dimension_numbers<[1], [0], [0], [1], [0, 0, 1, 1], [], []>} : vector<16x12xbf16>, vector<12x128xbf16>, vector<16x128xf32> -> vector<16x128xf32>
    %c0_23 = arith.constant 0 : index
    %28 = arith.index_cast %c2_i32 : i32 to index
    %c0_24 = arith.constant 0 : index
    %c0_25 = arith.constant 0 : index
    %29 = vector.load %arg4[%c0_23, %28, %c0_24, %c0_25] : memref<1x4x16x128xf32, #tpu.memory_space<vmem>>, vector<1x1x16x128xf32>
    %30 = vector.shape_cast %29 : vector<1x1x16x128xf32> to vector<16x128xf32>
    %31 = vector.shape_cast %27 : vector<16x128xf32> to vector<1x1x16x128xf32>
    tpu.vector_store %arg4[%c0_23, %28, %c0_24, %c0_25], %31 {strides = array<i32>} : memref<1x4x16x128xf32, #tpu.memory_space<vmem>>, vector<1x1x16x128xf32>,
    %c3_i32 = arith.constant 3 : i32
    %c0_26 = arith.constant 0 : index
    %32 = arith.index_cast %c3_i32 : i32 to index
    %c0_27 = arith.constant 0 : index
    %c0_28 = arith.constant 0 : index
    %33 = vector.load %arg2[%c0_26, %32, %c0_27, %c0_28] : memref<1x4x12x16xbf16, #tpu.memory_space<vmem>>, vector<1x1x12x16xbf16>
    %34 = vector.shape_cast %33 : vector<1x1x12x16xbf16> to vector<12x16xbf16>
    %cst_29 = arith.constant dense<0.000000e+00> : vector<12x128xf32>
    %35 = tpu.matmul %34, %1, %cst_29 {dimension_numbers = #tpu.dot_dimension_numbers<[1], [0], [0], [1], [0, 0, 1, 1], [], []>} : vector<12x16xbf16>, vector<16x128xbf16>, vector<12x128xf32> -> vector<12x128xf32>
    %36 = arith.truncf %35 : vector<12x128xf32> to vector<12x128xbf16>
    %cst_30 = arith.constant dense<0.000000e+00> : vector<16x128xf32>
    %37 = tpu.matmul %0, %36, %cst_30 {dimension_numbers = #tpu.dot_dimension_numbers<[1], [0], [0], [1], [0, 0, 1, 1], [], []>} : vector<16x12xbf16>, vector<12x128xbf16>, vector<16x128xf32> -> vector<16x128xf32>
    %c0_31 = arith.constant 0 : index
    %38 = arith.index_cast %c3_i32 : i32 to index
    %c0_32 = arith.constant 0 : index
    %c0_33 = arith.constant 0 : index
    %39 = vector.load %arg4[%c0_31, %38, %c0_32, %c0_33] : memref<1x4x16x128xf32, #tpu.memory_space<vmem>>, vector<1x1x16x128xf32>
    %40 = vector.shape_cast %39 : vector<1x1x16x128xf32> to vector<16x128xf32>
    %41 = vector.shape_cast %37 : vector<16x128xf32> to vector<1x1x16x128xf32>
    tpu.vector_store %arg4[%c0_31, %38, %c0_32, %c0_33], %41 {strides = array<i32>} : memref<1x4x16x128xf32, #tpu.memory_space<vmem>>, vector<1x1x16x128xf32>,
    %c4_i32 = arith.constant 4 : i32
    return
  }
  func.func @transform_0(%arg0: i32) -> (i32, i32) {
    %c0_i32 = arith.constant 0 : i32
    %c0_i32_0 = arith.constant 0 : i32
    %c0_i32_1 = arith.constant 0 : i32
    return %c0_i32, %c0_i32_0 : i32, i32
  }
  func.func @transform_1(%arg0: i32) -> (i32, i32, i32, i32) {
    %c0_i32 = arith.constant 0 : i32
    %c0_i32_0 = arith.constant 0 : i32
    %c0_i32_1 = arith.constant 0 : i32
    %c0_i32_2 = arith.constant 0 : i32
    return %arg0, %c0_i32, %c0_i32_0, %c0_i32_1 : i32, i32, i32, i32
  }
  func.func @transform_2(%arg0: i32) -> (i32, i32) {
    %c0_i32 = arith.constant 0 : i32
    %c0_i32_0 = arith.constant 0 : i32
    %c0_i32_1 = arith.constant 0 : i32
    return %c0_i32, %c0_i32_0 : i32, i32
  }
  func.func @transform_3(%arg0: i32) -> (i32, i32, i32, i32) {
    %c0_i32 = arith.constant 0 : i32
    %c0_i32_0 = arith.constant 0 : i32
    %c0_i32_1 = arith.constant 0 : i32
    %c0_i32_2 = arith.constant 0 : i32
    return %arg0, %c0_i32, %c0_i32_0, %c0_i32_1 : i32, i32, i32, i32
  }
}

</mosaic_0001>

<llo_original>
// kernel: tpu_custom_call.1
$region0: #{tpu_custom_call.1}
  #allocation0 [shape = 'u32[]', space=smem, size = 0x4, offset = 0x4, fixed_abs, tag = 'smem constant byte address 0x4 - core index']
  #allocation1 [shape = 'u32[144,128]{1,0:T(1,128)}', space=vmem, size = 0x12000, scoped, tag = 'internal scratch']
  %s0 = inlined_call_operand.vmem [shape: bf16[16,12], index: 0, kind: input, shape index: {}]
  %s1 = inlined_call_operand.vmem [shape: bf16[2,4,12,16], index: 1, kind: input, shape index: {}]
  %s2 = inlined_call_operand.vmem [shape: bf16[16,128], index: 2, kind: input, shape index: {}]
  %s3 = inlined_call_operand.hbm [shape: f32[2,4,16,128], index: 3, kind: output, shape index: {}]
  %s4 = sld [smem:[#allocation0]]
  $region45: #{tpu_custom_call.1} parent=0
    _
  %s6 = ssub.s32 1, %s4
  %s7 = scalar_select 0, %s6, %s4
  $region1: #{tpu_custom_call.1} parent=0
    #allocation2 [shape = 'u8[65536]{0}', space=vmem, size = 0x10000, scoped, tag = 'output window, operand 0']
    #allocation3 [shape = 's32[2]{0}', space=sflag, size = 0x8, scoped, tag = 'scoped memory for tpu_custom_call.1']
    %8 = vsyncpa [#allocation3], 0
    %s9 = scalar_lea.sflag [#allocation3], 1
    %10 = vsyncpa %s9, 0
    loop: start=0, step=1, limit=4
    $region2: #{tpu_custom_call.1} parent=1 // loop_pre_header
      _
    $region3: #{tpu_custom_call.1} parent=1 // loop_header
      %s12 = sphi 0, %s16
      %p13 = scmp.ge.s32.totalorder %s12, 4
      %s20 = sphi 0, %s20
      %s22 = sphi 0, %s20
      %s23 = sphi 0, %s22
      %s37 = sphi 0, %s23
      %s43 = sphi 0, %s45
      %s46 = sphi 0, %s43
      %s47 = sphi 0, %s46
      %s63 = sphi 0, %s47
      %s67 = sphi 0, %s67
      %s69 = sphi 0, %s67
      %s70 = sphi 0, %s69
      %s84 = sphi 0, %s70
      %s90 = sphi 0, %s92
      %s93 = sphi 0, %s90
      %s94 = sphi 0, %s93
      %s110 = sphi 0, %s94
    $region4: #{tpu_custom_call.1} parent=1 // loop_header_branch
      %15 = sbr.rel (%p13) target = $region8
    $region5: #{tpu_custom_call.1} parent=1 // loop_body
      %s17 = ssub.s32 %s12, 1
      %s18 = ssub.s32 %s12, 2
      %s19 = sadd.s32 %s12, 1
      %s21 = sadd.s32 %s20, 1
      %p24 = scmp.eq.s32.totalorder %s12, 1
      %p25 = scmp.ne.s32.totalorder %s20, %s22
      %p26 = scmp.eq.s32.totalorder %s12, 0
      %p27 = por %p25, %p26
      %p28 = scmp.ne.s32.totalorder %s20, %s22
      %p29 = scmp.eq.s32.totalorder %s17, 1
      %p30 = por %p28, %p29
      %p31 = scmp.ne.s32.totalorder %s22, %s23
      %p32 = scmp.eq.s32.totalorder %s17, 0
      %p33 = por %p31, %p32
      %p34 = scmp.ne.s32.totalorder %s22, %s23
      %p35 = scmp.eq.s32.totalorder %s18, 1
      %p36 = por %p34, %p35
      %p38 = scmp.ne.s32.totalorder %s23, %s37
      %p39 = scmp.eq.s32.totalorder %s18, 0
      %p40 = por %p38, %p39
      %s41 = ssub.s32 %s12, %s19
      %p42 = scmp.eq.s32.totalorder %s41, 0
      %s44 = sadd.s32 %s43, 1
      %s45 = scalar_select %p42, %s43, %s44
      %p48 = pneg %p42
      %p49 = scmp.eq.s32.totalorder %s12, 1
      %p50 = por %p48, %p49
      %p51 = scmp.ne.s32.totalorder %s43, %s46
      %p52 = scmp.eq.s32.totalorder %s12, 0
      %p53 = por %p51, %p52
      %p54 = scmp.ne.s32.totalorder %s43, %s46
      %p55 = scmp.eq.s32.totalorder %s17, 1
      %p56 = por %p54, %p55
      %p57 = scmp.ne.s32.totalorder %s46, %s47
      %p58 = scmp.eq.s32.totalorder %s17, 0
      %p59 = por %p57, %p58
      %p60 = scmp.ne.s32.totalorder %s46, %s47
      %p61 = scmp.eq.s32.totalorder %s18, 1
      %p62 = por %p60, %p61
      %p64 = scmp.ne.s32.totalorder %s47, %s63
      %p65 = scmp.eq.s32.totalorder %s18, 0
      %p66 = por %p64, %p65
      %s68 = sadd.s32 %s67, 1
      %p71 = scmp.eq.s32.totalorder %s12, 1
      %p72 = scmp.ne.s32.totalorder %s67, %s69
      %p73 = scmp.eq.s32.totalorder %s12, 0
      %p74 = por %p72, %p73
      %p75 = scmp.ne.s32.totalorder %s67, %s69
      %p76 = scmp.eq.s32.totalorder %s17, 1
      %p77 = por %p75, %p76
      %p78 = scmp.ne.s32.totalorder %s69, %s70
      %p79 = scmp.eq.s32.totalorder %s17, 0
      %p80 = por %p78, %p79
      %p81 = scmp.ne.s32.totalorder %s69, %s70
      %p82 = scmp.eq.s32.totalorder %s18, 1
      %p83 = por %p81, %p82
      %p85 = scmp.ne.s32.totalorder %s70, %s84
      %p86 = scmp.eq.s32.totalorder %s18, 0
      %p87 = por %p85, %p86
      %s88 = ssub.s32 %s12, %s19
      %p89 = scmp.eq.s32.totalorder %s88, 0
      %s91 = sadd.s32 %s90, 1
      %s92 = scalar_select %p89, %s90, %s91
      %p95 = pneg %p89
      %p96 = scmp.eq.s32.totalorder %s12, 1
      %p97 = por %p95, %p96
      %p98 = scmp.ne.s32.totalorder %s90, %s93
      %p99 = scmp.eq.s32.totalorder %s12, 0
      %p100 = por %p98, %p99
      %p101 = scmp.ne.s32.totalorder %s90, %s93
      %p102 = scmp.eq.s32.totalorder %s17, 1
      %p103 = por %p101, %p102
      %p104 = scmp.ne.s32.totalorder %s93, %s94
      %p105 = scmp.eq.s32.totalorder %s17, 0
      %p106 = por %p104, %p105
      %p107 = scmp.ne.s32.totalorder %s93, %s94
      %p108 = scmp.eq.s32.totalorder %s18, 1
      %p109 = por %p107, %p108
      %p111 = scmp.ne.s32.totalorder %s94, %s110
      %p112 = scmp.eq.s32.totalorder %s18, 0
      %p113 = por %p111, %p112
      %p114 = scmp.le.s32.totalorder 1, %s12
      %p115 = scmp.lt.s32.totalorder %s12, 3
      %p116 = pnand %p114, %p115
      %p117 = pneg %p116
      // Predicated region
      $region9: #{tpu_custom_call.1} parent=5 // pred_check
        _
      $region10: #{tpu_custom_call.1} parent=5 // pred_check_branch
        %119 = sbr.rel (%p116) target = $region12
      $region11: #{tpu_custom_call.1} parent=5 // pred_region
        %s120 = ssub.s32 %s12, 1
        // Predicated region
        $region13: #{tpu_custom_call.1} parent=11 // pred_check
          %p121 = pneg %p33
        $region14: #{tpu_custom_call.1} parent=11 // pred_check_branch
          %123 = sbr.rel (%p121) target = $region16
        $region15: #{tpu_custom_call.1} parent=11 // pred_region
          _
        $region16: #{tpu_custom_call.1} parent=11 // pred_fallthru
          _
        // Predicated region
        $region17: #{tpu_custom_call.1} parent=11 // pred_check
          %p124 = pneg %p80
        $region18: #{tpu_custom_call.1} parent=11 // pred_check_branch
          %126 = sbr.rel (%p124) target = $region20
        $region19: #{tpu_custom_call.1} parent=11 // pred_region
          _
        $region20: #{tpu_custom_call.1} parent=11 // pred_fallthru
          _
      $region12: #{tpu_custom_call.1} parent=5 // pred_fallthru
        _
      %p127 = scmp.lt.s32.totalorder %s12, 2
      // Predicated region
      $region21: #{tpu_custom_call.1} parent=5 // pred_check
        %p128 = pneg %p127
      $region22: #{tpu_custom_call.1} parent=5 // pred_check_branch
        %130 = sbr.rel (%p128) target = $region24
      $region23: #{tpu_custom_call.1} parent=5 // pred_region
        // Predicated region
        $region25: #{tpu_custom_call.1} parent=23 // pred_check
          %p131 = pneg %p53
        $region26: #{tpu_custom_call.1} parent=23 // pred_check_branch
          %133 = sbr.rel (%p131) target = $region28
        $region27: #{tpu_custom_call.1} parent=23 // pred_region
          %p134 = scmp.lt.s32.totalorder %s12, 1
          %s135 = scalar_select %p134, %s12, 1
          %s136 = smul.addr %s135, 8
          %s137 = smul.addr %s136, 4
          %s138 = scalar_lea.vmem %s1, %s137
        $region28: #{tpu_custom_call.1} parent=23 // pred_fallthru
          _
      $region24: #{tpu_custom_call.1} parent=5 // pred_fallthru
        _
      %p139 = scmp.le.s32.totalorder 1, %s12
      %p140 = scmp.lt.s32.totalorder %s12, 3
      %p141 = pnand %p139, %p140
      %p142 = pneg %p141
      // Predicated region
      $region29: #{tpu_custom_call.1} parent=5 // pred_check
        _
      $region30: #{tpu_custom_call.1} parent=5 // pred_check_branch
        %144 = sbr.rel (%p141) target = $region32
      $region31: #{tpu_custom_call.1} parent=5 // pred_region
        %s145 = ssub.s32 %s12, 1
        %p146 = pneg %p33
        %p147 = pneg %p30
        %p148 = scmp.lt.s32.totalorder %s17, 1
        %s149 = scalar_select %p148, %s17, 1
        %s150 = smul.addr %s149, 8
        %s151 = smul.addr %s150, 4
        %s152 = scalar_lea.vmem %s1, %s151
        %p153 = pneg %p59
        %p154 = pneg %p56
        %p155 = pneg %p80
        %p156 = pneg %p77
        %p157 = pneg %p106
        %p158 = pneg %p103
        %s159 = sand.u32 %s93, 1
        %s160 = scalar_lea.sflag [#allocation3], %s159
        %s161 = sand.u32 %s93, 1
        %s162 = smul.addr %s161, 64
        %s163 = scalar_lea.vmem [#allocation2], %s162
        %p164 = scmp.lt.s32.totalorder %s17, 1
        %s165 = scalar_select %p164, %s17, 1
        %s166 = smul.addr %s165, 8
        %s167 = smul.addr %s166, 4
        %s168 = scalar_lea.vmem %s1, %s167
        %v170 = vld [vmem:[%s0] sm:$0xf]
        %v171 = vld [vmem:[%s0 + $0x4] sm:$0xf]
        %v172 = vld [vmem:[%s2] sm:$0xf]
        %v173 = vld [vmem:[%s2 + $0x4] sm:$0xf]
        %v174 = vld [vmem:[%s168] sm:$0xf]
        %v175 = vld [vmem:[%s168 + $0x4] sm:$0x3]
        %v178 = vunpack.c.l.b16 %v174
        %v179 = vunpack.c.l.b16 %v175
        %v180 = vpack.c.b16 %v179, %v178
        %v183 = vunpack.c.l.b16 %v172
        %v184 = vunpack.c.l.b16 %v173
        %v185 = vpack.c.b16 %v184, %v183
        %vm187 = vcmask 130048
        %v189 = vsel %vm187, %v180, 0
        %191 = vmatprep.subr.bf16.mxu0 0
        %192 = vmatpush1.bf16.msra.mxu0 %v185
        %193 = vmatprep.subr.bf16.mxu0 0
        %194 = vmatpush1.bf16.msra.mxu0 0
        %195 = vmatprep.subr.bf16.mxu0 0
        %196 = vmatpush1.bf16.msra.mxu0 0
        %197 = vmatprep.subr.bf16.mxu0 0
        %198 = vmatpush1.bf16.msra.mxu0 0
        %199 = vmatprep.subr.bf16.mxu0 0
        %200 = vmatpush1.bf16.msra.mxu0 0
        %201 = vmatprep.subr.bf16.mxu0 0
        %202 = vmatpush1.bf16.msra.mxu0 0
        %203 = vmatprep.subr.bf16.mxu0 0
        %204 = vmatpush1.bf16.msra.mxu0 0
        %205 = vmatprep.subr.bf16.mxu0 0
        %206 = vmatpush1.bf16.msra.mxu0 0
        %207 = vmatprep.subr.bf16.mxu0 0
        %208 = vmatpush1.bf16.msra.mxu0 0
        %209 = vmatprep.subr.bf16.mxu0 0
        %210 = vmatpush1.bf16.msra.mxu0 0
        %211 = vmatprep.subr.bf16.mxu0 0
        %212 = vmatpush1.bf16.msra.mxu0 0
        %213 = vmatprep.subr.bf16.mxu0 0
        %214 = vmatpush1.bf16.msra.mxu0 0
        %215 = vmatprep.subr.bf16.mxu0 0
        %216 = vmatpush1.bf16.msra.mxu0 0
        %217 = vmatprep.subr.bf16.mxu0 0
        %218 = vmatpush1.bf16.msra.mxu0 0
        %219 = vmatprep.subr.bf16.mxu0 0
        %220 = vmatpush1.bf16.msra.mxu0 0
        %221 = vmatprep.subr.bf16.mxu0 0
        %222 = vmatpush1.bf16.msra.mxu0 0
        %223 = vmatprep.mubr.bf16.mxu0 0
        %224 = vmatmul.mubr.bf16.gmra.mrb[0].mxu0 %v189
        %v225 = vpop.f32.mrb[0].mxu0
        %v226 = vadd.f32 0.0, %v225
        %v227 = vpop.f32.mrb[0].mxu0
        %v228 = vpop.f32.mrb[0].mxu0
        %v229 = vadd.f32 0.0, %v228
        %v230 = vpop.f32.mrb[0].mxu0
        %231 = vdwg.mxu0
        %v232 = vpack.c.bf16 %v229, %v226
        %v235 = vunpack.c.l.b16 %v170
        %v236 = vunpack.c.l.b16 %v171
        %v237 = vpack.c.b16 %v236, %v235
        %vm238 = vcmask 97280
        %v240 = vsel %vm238, %v237, 0
        %vm242 = vcmask 1045504
        %v244 = vsel %vm242, %v232, 0
        %246 = vmatprep.subr.bf16.mxu0 0
        %247 = vmatpush1.bf16.msra.mxu0 %v244
        %248 = vmatprep.subr.bf16.mxu0 0
        %249 = vmatpush1.bf16.msra.mxu0 0
        %250 = vmatprep.subr.bf16.mxu0 0
        %251 = vmatpush1.bf16.msra.mxu0 0
        %252 = vmatprep.subr.bf16.mxu0 0
        %253 = vmatpush1.bf16.msra.mxu0 0
        %254 = vmatprep.subr.bf16.mxu0 0
        %255 = vmatpush1.bf16.msra.mxu0 0
        %256 = vmatprep.subr.bf16.mxu0 0
        %257 = vmatpush1.bf16.msra.mxu0 0
        %258 = vmatprep.subr.bf16.mxu0 0
        %259 = vmatpush1.bf16.msra.mxu0 0
        %260 = vmatprep.subr.bf16.mxu0 0
        %261 = vmatpush1.bf16.msra.mxu0 0
        %262 = vmatprep.subr.bf16.mxu0 0
        %263 = vmatpush1.bf16.msra.mxu0 0
        %264 = vmatprep.subr.bf16.mxu0 0
        %265 = vmatpush1.bf16.msra.mxu0 0
        %266 = vmatprep.subr.bf16.mxu0 0
        %267 = vmatpush1.bf16.msra.mxu0 0
        %268 = vmatprep.subr.bf16.mxu0 0
        %269 = vmatpush1.bf16.msra.mxu0 0
        %270 = vmatprep.subr.bf16.mxu0 0
        %271 = vmatpush1.bf16.msra.mxu0 0
        %272 = vmatprep.subr.bf16.mxu0 0
        %273 = vmatpush1.bf16.msra.mxu0 0
        %274 = vmatprep.subr.bf16.mxu0 0
        %275 = vmatpush1.bf16.msra.mxu0 0
        %276 = vmatprep.subr.bf16.mxu0 0
        %277 = vmatpush1.bf16.msra.mxu0 0
        %278 = vmatprep.mubr.bf16.mxu0 0
        %279 = vmatmul.mubr.bf16.gmra.mrb[0].mxu0 %v240
        %v280 = vpop.f32.mrb[0].mxu0
        %v281 = vadd.f32 0.0, %v280
        %v282 = vpop.f32.mrb[0].mxu0
        %v283 = vpop.f32.mrb[0].mxu0
        %v284 = vadd.f32 0.0, %v283
        %v285 = vpop.f32.mrb[0].mxu0
        %286 = vdwg.mxu0
        %287 = vst [vmem:[%s163] sm:$0xff] %v281
        %288 = vst [vmem:[%s163 + $0x8] sm:$0xff] %v284
        %s289 = scalar_lea.vmem %s168, 8
        %v290 = vld [vmem:[%s289] sm:$0xf]
        %v291 = vld [vmem:[%s289 + $0x4] sm:$0x3]
        %v294 = vunpack.c.l.b16 %v290
        %v295 = vunpack.c.l.b16 %v291
        %v296 = vpack.c.b16 %v295, %v294
        %v298 = vsel %vm187, %v296, 0
        %300 = vmatprep.subr.bf16.mxu0 0
        %301 = vmatpush1.bf16.msra.mxu0 %v185
        %302 = vmatprep.subr.bf16.mxu0 0
        %303 = vmatpush1.bf16.msra.mxu0 0
        %304 = vmatprep.subr.bf16.mxu0 0
        %305 = vmatpush1.bf16.msra.mxu0 0
        %306 = vmatprep.subr.bf16.mxu0 0
        %307 = vmatpush1.bf16.msra.mxu0 0
        %308 = vmatprep.subr.bf16.mxu0 0
        %309 = vmatpush1.bf16.msra.mxu0 0
        %310 = vmatprep.subr.bf16.mxu0 0
        %311 = vmatpush1.bf16.msra.mxu0 0
        %312 = vmatprep.subr.bf16.mxu0 0
        %313 = vmatpush1.bf16.msra.mxu0 0
        %314 = vmatprep.subr.bf16.mxu0 0
        %315 = vmatpush1.bf16.msra.mxu0 0
        %316 = vmatprep.subr.bf16.mxu0 0
        %317 = vmatpush1.bf16.msra.mxu0 0
        %318 = vmatprep.subr.bf16.mxu0 0
        %319 = vmatpush1.bf16.msra.mxu0 0
        %320 = vmatprep.subr.bf16.mxu0 0
        %321 = vmatpush1.bf16.msra.mxu0 0
        %322 = vmatprep.subr.bf16.mxu0 0
        %323 = vmatpush1.bf16.msra.mxu0 0
        %324 = vmatprep.subr.bf16.mxu0 0
        %325 = vmatpush1.bf16.msra.mxu0 0
        %326 = vmatprep.subr.bf16.mxu0 0
        %327 = vmatpush1.bf16.msra.mxu0 0
        %328 = vmatprep.subr.bf16.mxu0 0
        %329 = vmatpush1.bf16.msra.mxu0 0
        %330 = vmatprep.subr.bf16.mxu0 0
        %331 = vmatpush1.bf16.msra.mxu0 0
        %332 = vmatprep.mubr.bf16.mxu0 0
        %333 = vmatmul.mubr.bf16.gmra.mrb[0].mxu0 %v298
        %v334 = vpop.f32.mrb[0].mxu0
        %v335 = vadd.f32 0.0, %v334
        %v336 = vpop.f32.mrb[0].mxu0
        %v337 = vpop.f32.mrb[0].mxu0
        %v338 = vadd.f32 0.0, %v337
        %v339 = vpop.f32.mrb[0].mxu0
        %340 = vdwg.mxu0
        %v341 = vpack.c.bf16 %v338, %v335
        %v343 = vsel %vm242, %v341, 0
        %345 = vmatprep.subr.bf16.mxu0 0
        %346 = vmatpush1.bf16.msra.mxu0 %v343
        %347 = vmatprep.subr.bf16.mxu0 0
        %348 = vmatpush1.bf16.msra.mxu0 0
        %349 = vmatprep.subr.bf16.mxu0 0
        %350 = vmatpush1.bf16.msra.mxu0 0
        %351 = vmatprep.subr.bf16.mxu0 0
        %352 = vmatpush1.bf16.msra.mxu0 0
        %353 = vmatprep.subr.bf16.mxu0 0
        %354 = vmatpush1.bf16.msra.mxu0 0
        %355 = vmatprep.subr.bf16.mxu0 0
        %356 = vmatpush1.bf16.msra.mxu0 0
        %357 = vmatprep.subr.bf16.mxu0 0
        %358 = vmatpush1.bf16.msra.mxu0 0
        %359 = vmatprep.subr.bf16.mxu0 0
        %360 = vmatpush1.bf16.msra.mxu0 0
        %361 = vmatprep.subr.bf16.mxu0 0
        %362 = vmatpush1.bf16.msra.mxu0 0
        %363 = vmatprep.subr.bf16.mxu0 0
        %364 = vmatpush1.bf16.msra.mxu0 0
        %365 = vmatprep.subr.bf16.mxu0 0
        %366 = vmatpush1.bf16.msra.mxu0 0
        %367 = vmatprep.subr.bf16.mxu0 0
        %368 = vmatpush1.bf16.msra.mxu0 0
        %369 = vmatprep.subr.bf16.mxu0 0
        %370 = vmatpush1.bf16.msra.mxu0 0
        %371 = vmatprep.subr.bf16.mxu0 0
        %372 = vmatpush1.bf16.msra.mxu0 0
        %373 = vmatprep.subr.bf16.mxu0 0
        %374 = vmatpush1.bf16.msra.mxu0 0
        %375 = vmatprep.subr.bf16.mxu0 0
        %376 = vmatpush1.bf16.msra.mxu0 0
        %377 = vmatprep.mubr.bf16.mxu0 0
        %378 = vmatmul.mubr.bf16.gmra.mrb[0].mxu0 %v240
        %v379 = vpop.f32.mrb[0].mxu0
        %v380 = vadd.f32 0.0, %v379
        %v381 = vpop.f32.mrb[0].mxu0
        %v382 = vpop.f32.mrb[0].mxu0
        %v383 = vadd.f32 0.0, %v382
        %v384 = vpop.f32.mrb[0].mxu0
        %385 = vdwg.mxu0
        %s386 = scalar_lea.vmem %s163, 16 [#allocation2]
        %387 = vst [vmem:[%s386] sm:$0xff] %v380
        %388 = vst [vmem:[%s386 + $0x8] sm:$0xff] %v383
        %s389 = scalar_lea.vmem %s168, 16
        %v390 = vld [vmem:[%s389] sm:$0xf]
        %v391 = vld [vmem:[%s389 + $0x4] sm:$0x3]
        %v394 = vunpack.c.l.b16 %v390
        %v395 = vunpack.c.l.b16 %v391
        %v396 = vpack.c.b16 %v395, %v394
        %v398 = vsel %vm187, %v396, 0
        %400 = vmatprep.subr.bf16.mxu0 0
        %401 = vmatpush1.bf16.msra.mxu0 %v185
        %402 = vmatprep.subr.bf16.mxu0 0
        %403 = vmatpush1.bf16.msra.mxu0 0
        %404 = vmatprep.subr.bf16.mxu0 0
        %405 = vmatpush1.bf16.msra.mxu0 0
        %406 = vmatprep.subr.bf16.mxu0 0
        %407 = vmatpush1.bf16.msra.mxu0 0
        %408 = vmatprep.subr.bf16.mxu0 0
        %409 = vmatpush1.bf16.msra.mxu0 0
        %410 = vmatprep.subr.bf16.mxu0 0
        %411 = vmatpush1.bf16.msra.mxu0 0
        %412 = vmatprep.subr.bf16.mxu0 0
        %413 = vmatpush1.bf16.msra.mxu0 0
        %414 = vmatprep.subr.bf16.mxu0 0
        %415 = vmatpush1.bf16.msra.mxu0 0
        %416 = vmatprep.subr.bf16.mxu0 0
        %417 = vmatpush1.bf16.msra.mxu0 0
        %418 = vmatprep.subr.bf16.mxu0 0
        %419 = vmatpush1.bf16.msra.mxu0 0
        %420 = vmatprep.subr.bf16.mxu0 0
        %421 = vmatpush1.bf16.msra.mxu0 0
        %422 = vmatprep.subr.bf16.mxu0 0
        %423 = vmatpush1.bf16.msra.mxu0 0
        %424 = vmatprep.subr.bf16.mxu0 0
        %425 = vmatpush1.bf16.msra.mxu0 0
        %426 = vmatprep.subr.bf16.mxu0 0
        %427 = vmatpush1.bf16.msra.mxu0 0
        %428 = vmatprep.subr.bf16.mxu0 0
        %429 = vmatpush1.bf16.msra.mxu0 0
        %430 = vmatprep.subr.bf16.mxu0 0
        %431 = vmatpush1.bf16.msra.mxu0 0
        %432 = vmatprep.mubr.bf16.mxu0 0
        %433 = vmatmul.mubr.bf16.gmra.mrb[0].mxu0 %v398
        %v434 = vpop.f32.mrb[0].mxu0
        %v435 = vadd.f32 0.0, %v434
        %v436 = vpop.f32.mrb[0].mxu0
        %v437 = vpop.f32.mrb[0].mxu0
        %v438 = vadd.f32 0.0, %v437
        %v439 = vpop.f32.mrb[0].mxu0
        %440 = vdwg.mxu0
        %v441 = vpack.c.bf16 %v438, %v435
        %v443 = vsel %vm242, %v441, 0
        %445 = vmatprep.subr.bf16.mxu0 0
        %446 = vmatpush1.bf16.msra.mxu0 %v443
        %447 = vmatprep.subr.bf16.mxu0 0
        %448 = vmatpush1.bf16.msra.mxu0 0
        %449 = vmatprep.subr.bf16.mxu0 0
        %450 = vmatpush1.bf16.msra.mxu0 0
        %451 = vmatprep.subr.bf16.mxu0 0
        %452 = vmatpush1.bf16.msra.mxu0 0
        %453 = vmatprep.subr.bf16.mxu0 0
        %454 = vmatpush1.bf16.msra.mxu0 0
        %455 = vmatprep.subr.bf16.mxu0 0
        %456 = vmatpush1.bf16.msra.mxu0 0
        %457 = vmatprep.subr.bf16.mxu0 0
        %458 = vmatpush1.bf16.msra.mxu0 0
        %459 = vmatprep.subr.bf16.mxu0 0
        %460 = vmatpush1.bf16.msra.mxu0 0
        %461 = vmatprep.subr.bf16.mxu0 0
        %462 = vmatpush1.bf16.msra.mxu0 0
        %463 = vmatprep.subr.bf16.mxu0 0
        %464 = vmatpush1.bf16.msra.mxu0 0
        %465 = vmatprep.subr.bf16.mxu0 0
        %466 = vmatpush1.bf16.msra.mxu0 0
        %467 = vmatprep.subr.bf16.mxu0 0
        %468 = vmatpush1.bf16.msra.mxu0 0
        %469 = vmatprep.subr.bf16.mxu0 0
        %470 = vmatpush1.bf16.msra.mxu0 0
        %471 = vmatprep.subr.bf16.mxu0 0
        %472 = vmatpush1.bf16.msra.mxu0 0
        %473 = vmatprep.subr.bf16.mxu0 0
        %474 = vmatpush1.bf16.msra.mxu0 0
        %475 = vmatprep.subr.bf16.mxu0 0
        %476 = vmatpush1.bf16.msra.mxu0 0
        %477 = vmatprep.mubr.bf16.mxu0 0
        %478 = vmatmul.mubr.bf16.gmra.mrb[0].mxu0 %v240
        %v479 = vpop.f32.mrb[0].mxu0
        %v480 = vadd.f32 0.0, %v479
        %v481 = vpop.f32.mrb[0].mxu0
        %v482 = vpop.f32.mrb[0].mxu0
        %v483 = vadd.f32 0.0, %v482
        %v484 = vpop.f32.mrb[0].mxu0
        %485 = vdwg.mxu0
        %s486 = scalar_lea.vmem %s163, 32 [#allocation2]
        %487 = vst [vmem:[%s486] sm:$0xff] %v480
        %488 = vst [vmem:[%s486 + $0x8] sm:$0xff] %v483
        %s489 = scalar_lea.vmem %s168, 24
        %v490 = vld [vmem:[%s489] sm:$0xf]
        %v491 = vld [vmem:[%s489 + $0x4] sm:$0x3]
        %v494 = vunpack.c.l.b16 %v490
        %v495 = vunpack.c.l.b16 %v491
        %v496 = vpack.c.b16 %v495, %v494
        %v498 = vsel %vm187, %v496, 0
        %500 = vmatprep.subr.bf16.mxu0 0
        %501 = vmatpush1.bf16.msra.mxu0 %v185
        %502 = vmatprep.subr.bf16.mxu0 0
        %503 = vmatpush1.bf16.msra.mxu0 0
        %504 = vmatprep.subr.bf16.mxu0 0
        %505 = vmatpush1.bf16.msra.mxu0 0
        %506 = vmatprep.subr.bf16.mxu0 0
        %507 = vmatpush1.bf16.msra.mxu0 0
        %508 = vmatprep.subr.bf16.mxu0 0
        %509 = vmatpush1.bf16.msra.mxu0 0
        %510 = vmatprep.subr.bf16.mxu0 0
        %511 = vmatpush1.bf16.msra.mxu0 0
        %512 = vmatprep.subr.bf16.mxu0 0
        %513 = vmatpush1.bf16.msra.mxu0 0
        %514 = vmatprep.subr.bf16.mxu0 0
        %515 = vmatpush1.bf16.msra.mxu0 0
        %516 = vmatprep.subr.bf16.mxu0 0
        %517 = vmatpush1.bf16.msra.mxu0 0
        %518 = vmatprep.subr.bf16.mxu0 0
        %519 = vmatpush1.bf16.msra.mxu0 0
        %520 = vmatprep.subr.bf16.mxu0 0
        %521 = vmatpush1.bf16.msra.mxu0 0
        %522 = vmatprep.subr.bf16.mxu0 0
        %523 = vmatpush1.bf16.msra.mxu0 0
        %524 = vmatprep.subr.bf16.mxu0 0
        %525 = vmatpush1.bf16.msra.mxu0 0
        %526 = vmatprep.subr.bf16.mxu0 0
        %527 = vmatpush1.bf16.msra.mxu0 0
        %528 = vmatprep.subr.bf16.mxu0 0
        %529 = vmatpush1.bf16.msra.mxu0 0
        %530 = vmatprep.subr.bf16.mxu0 0
        %531 = vmatpush1.bf16.msra.mxu0 0
        %532 = vmatprep.mubr.bf16.mxu0 0
        %533 = vmatmul.mubr.bf16.gmra.mrb[0].mxu0 %v498
        %v534 = vpop.f32.mrb[0].mxu0
        %v535 = vadd.f32 0.0, %v534
        %v536 = vpop.f32.mrb[0].mxu0
        %v537 = vpop.f32.mrb[0].mxu0
        %v538 = vadd.f32 0.0, %v537
        %v539 = vpop.f32.mrb[0].mxu0
        %540 = vdwg.mxu0
        %v541 = vpack.c.bf16 %v538, %v535
        %v543 = vsel %vm242, %v541, 0
        %545 = vmatprep.subr.bf16.mxu0 0
        %546 = vmatpush1.bf16.msra.mxu0 %v543
        %547 = vmatprep.subr.bf16.mxu0 0
        %548 = vmatpush1.bf16.msra.mxu0 0
        %549 = vmatprep.subr.bf16.mxu0 0
        %550 = vmatpush1.bf16.msra.mxu0 0
        %551 = vmatprep.subr.bf16.mxu0 0
        %552 = vmatpush1.bf16.msra.mxu0 0
        %553 = vmatprep.subr.bf16.mxu0 0
        %554 = vmatpush1.bf16.msra.mxu0 0
        %555 = vmatprep.subr.bf16.mxu0 0
        %556 = vmatpush1.bf16.msra.mxu0 0
        %557 = vmatprep.subr.bf16.mxu0 0
        %558 = vmatpush1.bf16.msra.mxu0 0
        %559 = vmatprep.subr.bf16.mxu0 0
        %560 = vmatpush1.bf16.msra.mxu0 0
        %561 = vmatprep.subr.bf16.mxu0 0
        %562 = vmatpush1.bf16.msra.mxu0 0
        %563 = vmatprep.subr.bf16.mxu0 0
        %564 = vmatpush1.bf16.msra.mxu0 0
        %565 = vmatprep.subr.bf16.mxu0 0
        %566 = vmatpush1.bf16.msra.mxu0 0
        %567 = vmatprep.subr.bf16.mxu0 0
        %568 = vmatpush1.bf16.msra.mxu0 0
        %569 = vmatprep.subr.bf16.mxu0 0
        %570 = vmatpush1.bf16.msra.mxu0 0
        %571 = vmatprep.subr.bf16.mxu0 0
        %572 = vmatpush1.bf16.msra.mxu0 0
        %573 = vmatprep.subr.bf16.mxu0 0
        %574 = vmatpush1.bf16.msra.mxu0 0
        %575 = vmatprep.subr.bf16.mxu0 0
        %576 = vmatpush1.bf16.msra.mxu0 0
        %577 = vmatprep.mubr.bf16.mxu0 0
        %578 = vmatmul.mubr.bf16.gmra.mrb[0].mxu0 %v240
        %v579 = vpop.f32.mrb[0].mxu0
        %v580 = vadd.f32 0.0, %v579
        %v581 = vpop.f32.mrb[0].mxu0
        %v582 = vpop.f32.mrb[0].mxu0
        %v583 = vadd.f32 0.0, %v582
        %v584 = vpop.f32.mrb[0].mxu0
        %585 = vdwg.mxu0
        %s586 = scalar_lea.vmem %s163, 48 [#allocation2]
        %587 = vst [vmem:[%s586] sm:$0xff] %v580
        %588 = vst [vmem:[%s586 + $0x8] sm:$0xff] %v583
        %s589 = sand.u32 %s93, 1
        %s590 = scalar_lea.sflag [#allocation3], %s589
        %s591 = sand.u32 %s93, 1
        %s592 = smul.addr %s591, 64
        %s593 = scalar_lea.vmem [#allocation2], %s592
        // Predicated region
        $region33: #{tpu_custom_call.1} parent=31 // pred_check
          %p594 = pneg %p103
        $region34: #{tpu_custom_call.1} parent=31 // pred_check_branch
          %596 = sbr.rel (%p594) target = $region36
        $region35: #{tpu_custom_call.1} parent=31 // pred_region
          %s598 = ssub.s32 1024, 1024
          %599 = vsyncadd %s590, %s598
          %s600 = smul.addr %s17, 8
          %s601 = smul.addr %s600, 128
          %s602 = scalar_lea.hbm %s3, %s601
          %s603 = sshll.u32 %s593, 4
          %s604 = int_to_ptr.vmem [resolvable:$true] %s603
          %609 = dma.vmem_to_hbm [thread:$0]  %s604, 1024, %s602, %s590, 128, 128, 8
        $region36: #{tpu_custom_call.1} parent=31 // pred_fallthru
          _
      $region32: #{tpu_custom_call.1} parent=5 // pred_fallthru
        _
      %p610 = scmp.le.s32.totalorder 2, %s12
      // Predicated region
      $region37: #{tpu_custom_call.1} parent=5 // pred_check
        %p611 = pneg %p610
      $region38: #{tpu_custom_call.1} parent=5 // pred_check_branch
        %613 = sbr.rel (%p611) target = $region40
      $region39: #{tpu_custom_call.1} parent=5 // pred_region
        %s614 = ssub.s32 %s12, 2
        // Predicated region
        $region41: #{tpu_custom_call.1} parent=39 // pred_check
          %p615 = pneg %p109
        $region42: #{tpu_custom_call.1} parent=39 // pred_check_branch
          %617 = sbr.rel (%p615) target = $region44
        $region43: #{tpu_custom_call.1} parent=39 // pred_region
          %s618 = sand.u32 %s94, 1
          %s619 = scalar_lea.sflag [#allocation3], %s618
          %s620 = sand.u32 %s94, 1
          %s621 = smul.addr %s620, 64
          %s622 = scalar_lea.vmem [#allocation2], %s621
          %623 = dma.done %s619, 1024
        $region44: #{tpu_custom_call.1} parent=39 // pred_fallthru
          _
      $region40: #{tpu_custom_call.1} parent=5 // pred_fallthru
        _
    $region6: #{tpu_custom_call.1} parent=1 // loop_footer
      %s16 = sadd.s32 1, %s12
    $region7: #{tpu_custom_call.1} parent=1 // loop_footer_branch
      %11 = sbr.rel target = $region3
    $region8: #{tpu_custom_call.1} parent=1 // loop_exit
      _
    %624 = vsyncpa [#allocation3], 1
    %s625 = scalar_lea.sflag [#allocation3], 1
    %626 = vsyncpa %s625, 1

</llo_original>
